<compile_context>
chip_gen: v7x
topology: tpu7x:2x2x1
jax: 0.10.0
libtpu: 0.0.40
codegen_flags: <defaults>
</compile_context>

<pallas_src>
import functools

import jax
import jax.numpy as jnp
from jax.experimental import pallas as pl
from jax.experimental.pallas import tpu as pltpu


def _round_up(n, m):
    return (n + m - 1) // m * m


def encoder_kernel(x_ref, wpack_ref, bpack_ref, out_ref, *, dims):
    """Fused MLP forward. `dims` holds static shape constants / slab offsets."""
    f32, bf16 = jnp.float32, jnp.bfloat16
    in_f, L0, L1 = dims["in_f"], dims["L0"], dims["L1"]
    HP, OPP, NC = dims["HP"], dims["OPP"], dims["num_cluster"]
    rw2, rwc2, lo = dims["rw2"], dims["rwc2"], dims["laneoff"]
    Brep = dims["Brep"]
    B = x_ref.shape[0]

    # encoder: Dropout(p=0) is identity; Lin+ReLU, Lin+ReLU (last ReLU stripped
    # by `layers[:-1]` in the PyTorch module). Weights/biases are read directly
    # at their use sites (static, tile-aligned ref slices) to keep live ranges
    # tight and avoid vreg spills.
    h = jnp.maximum(
        jnp.dot(x_ref[...].astype(bf16), wpack_ref[0:in_f, 0:L0],
                preferred_element_type=f32)
        + bpack_ref[0:B, 0:L0], 0.0)
    h = jnp.maximum(
        jnp.dot(h.astype(bf16), wpack_ref[rw2:rw2 + L0, 0:L1],
                preferred_element_type=f32)
        + bpack_ref[Brep:Brep + B, 0:L1], 0.0)

    # encoder last Linear -> fc -> classifier first Linear, fused to one matmul.
    z = (jnp.dot(h.astype(bf16), wpack_ref[rw2:rw2 + L1, lo:lo + HP],
                 preferred_element_type=f32)
         + bpack_ref[2 * Brep:2 * Brep + B, 0:HP])

    # BatchNorm1d (training mode, biased batch stats): one-pass stats + folded
    # affine, all in f32. Zero-padded lanes stay exactly zero (gamma/beta pad
    # is zero; wc2's padded rows are zero too, so this is doubly safe).
    inv_b = 1.0 / B
    mean = jnp.sum(z, axis=0, keepdims=True) * inv_b
    ex2 = jnp.sum(z * z, axis=0, keepdims=True) * inv_b
    var = jnp.maximum(ex2 - mean * mean, 0.0)          # clamp cancellation error
    s = jax.lax.rsqrt(var + 1e-5) * bpack_ref[3 * Brep:3 * Brep + B, 0:HP]
    z = jnp.maximum(z * s + (bpack_ref[4 * Brep:4 * Brep + B, 0:HP] - mean * s),
                    0.0)

    # classifier last Linear; slice the lane-padded result down to num_cluster
    # so the kernel emits the final (B, num_cluster) output directly.
    y = (jnp.dot(z.astype(bf16), wpack_ref[rwc2:rwc2 + HP, lo:lo + OPP],
                 preferred_element_type=f32)
         + bpack_ref[5 * Brep:5 * Brep + B, 0:OPP])
    out_ref[...] = y[:, :NC].astype(out_ref.dtype)


def pack_params(params, in_features, num_cluster, latent_features, batch):
    """Fuse the 3 consecutive Linears and pack all parameters into two buffers:
    one bf16 weight slab (tight two-column layout) and one f32 bias/BN slab
    (rows pre-replicated to sublanes). Done once, outside pallas_call."""
    L0, L1, L2 = latent_features
    hidden = L2 // 2
    HP = _round_up(max(hidden, 128), 128)        # lane-dense classifier hidden
    OPP = _round_up(max(num_cluster, 128), 128)  # lane-dense last-layer width

    # y = ((h @ w3 + b3) @ wfc + bfc) @ wc1 + bc1
    #   = h @ (w3 @ wfc @ wc1) + (b3 @ wfc @ wc1 + bfc @ wc1 + bc1)
    # Fusion done in f32, cast to bf16 once at the end.
    w_fused = params["w3"] @ params["wfc"] @ params["wc1"]            # (L1, hidden)
    b_fused = (params["b3"] @ params["wfc"] @ params["wc1"]
               + params["bfc"] @ params["wc1"] + params["bc1"])       # (1, hidden)

    # Tight weight slab layout (bf16, sublane tile 16 / lane tile 128):
    #   rows [0, in_f)        lanes [0, L0)           : w1
    #   rows [rw2, rw2+L0)    lanes [0, L1)           : w2
    #   rows [rw2, rw2+L1)    lanes [lo, lo+hidden)   : fused w3@wfc@wc1
    #   rows [rwc2, rwc2+hid) lanes [lo, lo+NC)       : wc2
    SUB = 16
    rw2 = _round_up(in_features, SUB)
    rwc2 = rw2 + _round_up(L1, SUB)
    laneoff = _round_up(L1, 128)
    C1 = max(HP, OPP)
    R = _round_up(max(rw2 + _round_up(L0, SUB), rwc2 + _round_up(HP, SUB)), SUB)
    W = _round_up(max(L0, laneoff + C1), 128)

    wpack = jnp.zeros((R, W), jnp.bfloat16)
    wpack = wpack.at[0:in_features, 0:L0].set(params["w1"].astype(jnp.bfloat16))
    wpack = wpack.at[rw2:rw2 + L0, 0:L1].set(params["w2"].astype(jnp.bfloat16))
    wpack = wpack.at[rw2:rw2 + L1, laneoff:laneoff + hidden].set(
        w_fused.astype(jnp.bfloat16))
    wpack = wpack.at[rwc2:rwc2 + hidden, laneoff:laneoff + num_cluster].set(
        params["wc2"].astype(jnp.bfloat16))

    # Bias / BN slab (f32): each vector replicated to Brep sublanes so the
    # in-kernel adds are plain full-tile vadds (no XLU sublane broadcasts).
    Brep = _round_up(max(batch, 8), 8)
    Wb = max(L0, L1, HP, OPP)
    rows = [
        (params["b1"][0], L0),
        (params["b2"][0], L1),
        (b_fused[0], hidden),
        (params["gamma"][0], hidden),
        (params["beta"][0], hidden),
        (params["bc2"][0], num_cluster),
    ]
    bpack = jnp.zeros((6 * Brep, Wb), jnp.float32)
    for i, (vec, width) in enumerate(rows):
        rep = jnp.broadcast_to(vec.astype(jnp.float32)[None, :width], (Brep, width))
        bpack = bpack.at[i * Brep:(i + 1) * Brep, 0:width].set(rep)

    dims = dict(in_f=in_features, L0=L0, L1=L1, HP=HP, OPP=OPP,
                rw2=rw2, rwc2=rwc2, laneoff=laneoff,
                num_cluster=num_cluster, Brep=Brep)
    return wpack, bpack, dims


def encoder_forward(x, wpack, bpack, *, dims):
    """Single-block Pallas call: at these sizes everything (<0.25 MiB) fits in
    VMEM on every TPU generation. x is cast to bf16 inside the kernel and the
    output is emitted un-padded, so there are no wrapper-side XLA ops.
    For large B, add grid=(B//TILE_B,) with dimension_semantics=("parallel",)
    and a two-pass BatchNorm (full-batch stats) before tiling."""
    B = x.shape[0]
    NC = dims["num_cluster"]
    kernel = functools.partial(encoder_kernel, dims=dims)
    flops = 2 * B * (dims["in_f"] * dims["L0"] + dims["L0"] * dims["L1"]
                     + dims["L1"] * dims["HP"] + dims["HP"] * dims["OPP"])
    bytes_accessed = (x.size * x.dtype.itemsize + wpack.size * 2
                      + bpack.size * 4 + B * NC * 4)
    return pl.pallas_call(
        kernel,
        out_shape=jax.ShapeDtypeStruct((B, NC), jnp.float32),
        in_specs=[pl.BlockSpec(memory_space=pltpu.MemorySpace.VMEM)] * 3,
        out_specs=pl.BlockSpec(memory_space=pltpu.MemorySpace.VMEM),
        cost_estimate=pl.CostEstimate(flops=flops, transcendentals=dims["HP"],
                                      bytes_accessed=bytes_accessed),
    )(x, wpack, bpack)


def init_params(key, in_features, num_cluster, latent_features):
    """Mirror the PyTorch module's parameter shapes.
    nn.Linear default init: U(-1/sqrt(fan_in), 1/sqrt(fan_in)).
    Weights stored as (in, out) so the kernel computes y = x @ W + b."""
    def linear(k, fan_in, fan_out):
        kw, kb = jax.random.split(k)
        bound = 1.0 / (fan_in ** 0.5)
        w = jax.random.uniform(kw, (fan_in, fan_out), jnp.float32, -bound, bound)
        b = jax.random.uniform(kb, (1, fan_out), jnp.float32, -bound, bound)
        return w, b

    hidden = latent_features[-1] // 2
    keys = jax.random.split(key, 6)
    w1, b1 = linear(keys[0], in_features, latent_features[0])
    w2, b2 = linear(keys[1], latent_features[0], latent_features[1])
    w3, b3 = linear(keys[2], latent_features[1], latent_features[2])
    wfc, bfc = linear(keys[3], latent_features[2], num_cluster)
    wc1, bc1 = linear(keys[4], latent_features[2], hidden)
    wc2, bc2 = linear(keys[5], hidden, num_cluster)
    gamma = jnp.ones((1, hidden), jnp.float32)   # BatchNorm1d defaults
    beta = jnp.zeros((1, hidden), jnp.float32)
    return dict(w1=w1, b1=b1, w2=w2, b2=b2, w3=w3, b3=b3,
                wfc=wfc, bfc=bfc, wc1=wc1, bc1=bc1,
                gamma=gamma, beta=beta, wc2=wc2, bc2=bc2)


def reference_forward(x, p):
    """Pure-JAX f32 reference of the original (unfused) module math."""
    h = jnp.maximum(x @ p["w1"] + p["b1"], 0.0)
    h = jnp.maximum(h @ p["w2"] + p["b2"], 0.0)
    h = h @ p["w3"] + p["b3"]
    out = h @ p["wfc"] + p["bfc"]
    z = out @ p["wc1"] + p["bc1"]
    mean = jnp.mean(z, axis=0, keepdims=True)
    var = jnp.mean((z - mean) ** 2, axis=0, keepdims=True)
    z = (z - mean) * jax.lax.rsqrt(var + 1e-5) * p["gamma"] + p["beta"]
    z = jnp.maximum(z, 0.0)
    return z @ p["wc2"] + p["bc2"]


if __name__ == "__main__":
    # Small shapes consistent with the module (num_cluster == latent_features[-1]
    # is required by the PyTorch forward to type-check).
    B = 8
    in_features = 64
    latent_features = [256, 128, 64]
    num_cluster = latent_features[-1]

    key = jax.random.PRNGKey(0)
    kx, kp = jax.random.split(key)
    x = jax.random.normal(kx, (B, in_features), jnp.float32)
    params = init_params(kp, in_features, num_cluster, latent_features)

    wpack, bpack, dims = pack_params(params, in_features, num_cluster,
                                     latent_features, batch=B)
    fwd = jax.jit(functools.partial(encoder_forward, dims=dims))
    out = jax.block_until_ready(fwd(x, wpack, bpack))

    ref = jax.block_until_ready(reference_forward(x, params))
    assert out.shape == (B, num_cluster)
    # bf16 MXU operands (f32 accumulation) vs. the all-f32 reference: allow
    # ~percent-level drift.
    assert jnp.allclose(out, ref, rtol=5e-2, atol=5e-2), "mismatch vs JAX reference"

    print("KERNEL_OK")
</pallas_src>

<mosaic_0001>
module attributes {stable_mosaic.version = 11 : i64} {
  func.func @encoder_kernel(%arg0: memref<8x64xf32, #tpu.memory_space<vmem>>, %arg1: memref<320x256xbf16, #tpu.memory_space<vmem>>, %arg2: memref<48x256xf32, #tpu.memory_space<vmem>>, %arg3: memref<8x64xf32, #tpu.memory_space<vmem>>) attributes {dimension_semantics = [], scalar_prefetch = 0 : i64, scratch_operands = 0 : i64, tpu.core_type = #tpu.core_type<tc>} {
    %c0 = arith.constant 0 : index
    %c0_0 = arith.constant 0 : index
    %0 = vector.load %arg0[%c0, %c0_0] : memref<8x64xf32, #tpu.memory_space<vmem>>, vector<8x64xf32>
    %1 = arith.truncf %0 : vector<8x64xf32> to vector<8x64xbf16>
    %c0_1 = arith.constant 0 : index
    %c0_2 = arith.constant 0 : index
    %2 = vector.load %arg1[%c0_1, %c0_2] : memref<320x256xbf16, #tpu.memory_space<vmem>>, vector<64x256xbf16>
    %cst = arith.constant dense<0.000000e+00> : vector<8x256xf32>
    %3 = tpu.matmul %1, %2, %cst {dimension_numbers = #tpu.dot_dimension_numbers<[1], [0], [0], [1], [0, 0, 1, 1], [], []>} : vector<8x64xbf16>, vector<64x256xbf16>, vector<8x256xf32> -> vector<8x256xf32>
    %c0_3 = arith.constant 0 : index
    %c0_4 = arith.constant 0 : index
    %4 = vector.load %arg2[%c0_3, %c0_4] : memref<48x256xf32, #tpu.memory_space<vmem>>, vector<8x256xf32>
    %5 = arith.addf %3, %4 : vector<8x256xf32>
    %cst_5 = arith.constant 0.000000e+00 : f32
    %6 = vector.broadcast %cst_5 : f32 to vector<8x256xf32>
    %7 = arith.maximumf %5, %6 : vector<8x256xf32>
    %8 = arith.truncf %7 : vector<8x256xf32> to vector<8x256xbf16>
    %c64 = arith.constant 64 : index
    %c0_6 = arith.constant 0 : index
    %9 = vector.load %arg1[%c64, %c0_6] : memref<320x256xbf16, #tpu.memory_space<vmem>>, vector<256x128xbf16>
    %cst_7 = arith.constant dense<0.000000e+00> : vector<8x128xf32>
    %10 = tpu.matmul %8, %9, %cst_7 {dimension_numbers = #tpu.dot_dimension_numbers<[1], [0], [0], [1], [0, 0, 1, 1], [], []>} : vector<8x256xbf16>, vector<256x128xbf16>, vector<8x128xf32> -> vector<8x128xf32>
    %c8 = arith.constant 8 : index
    %c0_8 = arith.constant 0 : index
    %11 = vector.load %arg2[%c8, %c0_8] : memref<48x256xf32, #tpu.memory_space<vmem>>, vector<8x128xf32>
    %12 = arith.addf %10, %11 : vector<8x128xf32>
    %cst_9 = arith.constant 0.000000e+00 : f32
    %13 = vector.broadcast %cst_9 : f32 to vector<8x128xf32>
    %14 = arith.maximumf %12, %13 : vector<8x128xf32>
    %15 = arith.truncf %14 : vector<8x128xf32> to vector<8x128xbf16>
    %c64_10 = arith.constant 64 : index
    %c128 = arith.constant 128 : index
    %16 = vector.load %arg1[%c64_10, %c128] : memref<320x256xbf16, #tpu.memory_space<vmem>>, vector<128x128xbf16>
    %cst_11 = arith.constant dense<0.000000e+00> : vector<8x128xf32>
    %17 = tpu.matmul %15, %16, %cst_11 {dimension_numbers = #tpu.dot_dimension_numbers<[1], [0], [0], [1], [0, 0, 1, 1], [], []>} : vector<8x128xbf16>, vector<128x128xbf16>, vector<8x128xf32> -> vector<8x128xf32>
    %c16 = arith.constant 16 : index
    %c0_12 = arith.constant 0 : index
    %18 = vector.load %arg2[%c16, %c0_12] : memref<48x256xf32, #tpu.memory_space<vmem>>, vector<8x128xf32>
    %19 = arith.addf %17, %18 : vector<8x128xf32>
    %cst_13 = arith.constant dense<0.000000e+00> : vector<128xf32>
    %20 = vector.multi_reduction <add>, %19, %cst_13 [0] : vector<8x128xf32> to vector<128xf32>
    %21 = vector.shape_cast %20 : vector<128xf32> to vector<1x128xf32>
    %cst_14 = arith.constant 1.250000e-01 : f32
    %22 = vector.broadcast %cst_14 : f32 to vector<1x128xf32>
    %23 = arith.mulf %21, %22 : vector<1x128xf32>
    %24 = arith.mulf %19, %19 : vector<8x128xf32>
    %cst_15 = arith.constant dense<0.000000e+00> : vector<128xf32>
    %25 = vector.multi_reduction <add>, %24, %cst_15 [0] : vector<8x128xf32> to vector<128xf32>
    %26 = vector.shape_cast %25 : vector<128xf32> to vector<1x128xf32>
    %cst_16 = arith.constant 1.250000e-01 : f32
    %27 = vector.broadcast %cst_16 : f32 to vector<1x128xf32>
    %28 = arith.mulf %26, %27 : vector<1x128xf32>
    %29 = arith.mulf %23, %23 : vector<1x128xf32>
    %30 = arith.subf %28, %29 : vector<1x128xf32>
    %cst_17 = arith.constant 0.000000e+00 : f32
    %31 = vector.broadcast %cst_17 : f32 to vector<1x128xf32>
    %32 = arith.maximumf %30, %31 : vector<1x128xf32>
    %cst_18 = arith.constant 9.99999974E-6 : f32
    %33 = vector.broadcast %cst_18 : f32 to vector<1x128xf32>
    %34 = arith.addf %32, %33 : vector<1x128xf32>
    %35 = math.rsqrt %34 : vector<1x128xf32>
    %c24 = arith.constant 24 : index
    %c0_19 = arith.constant 0 : index
    %36 = vector.load %arg2[%c24, %c0_19] : memref<48x256xf32, #tpu.memory_space<vmem>>, vector<8x128xf32>
    %37 = vector.broadcast %35 : vector<1x128xf32> to vector<8x128xf32>
    %38 = arith.mulf %37, %36 : vector<8x128xf32>
    %39 = arith.mulf %19, %38 : vector<8x128xf32>
    %c32 = arith.constant 32 : index
    %c0_20 = arith.constant 0 : index
    %40 = vector.load %arg2[%c32, %c0_20] : memref<48x256xf32, #tpu.memory_space<vmem>>, vector<8x128xf32>
    %41 = vector.broadcast %23 : vector<1x128xf32> to vector<8x128xf32>
    %42 = arith.mulf %41, %38 : vector<8x128xf32>
    %43 = arith.subf %40, %42 : vector<8x128xf32>
    %44 = arith.addf %39, %43 : vector<8x128xf32>
    %cst_21 = arith.constant 0.000000e+00 : f32
    %45 = vector.broadcast %cst_21 : f32 to vector<8x128xf32>
    %46 = arith.maximumf %44, %45 : vector<8x128xf32>
    %47 = arith.truncf %46 : vector<8x128xf32> to vector<8x128xbf16>
    %c192 = arith.constant 192 : index
    %c128_22 = arith.constant 128 : index
    %48 = vector.load %arg1[%c192, %c128_22] : memref<320x256xbf16, #tpu.memory_space<vmem>>, vector<128x128xbf16>
    %cst_23 = arith.constant dense<0.000000e+00> : vector<8x128xf32>
    %49 = tpu.matmul %47, %48, %cst_23 {dimension_numbers = #tpu.dot_dimension_numbers<[1], [0], [0], [1], [0, 0, 1, 1], [], []>} : vector<8x128xbf16>, vector<128x128xbf16>, vector<8x128xf32> -> vector<8x128xf32>
    %c40 = arith.constant 40 : index
    %c0_24 = arith.constant 0 : index
    %50 = vector.load %arg2[%c40, %c0_24] : memref<48x256xf32, #tpu.memory_space<vmem>>, vector<8x128xf32>
    %51 = arith.addf %49, %50 : vector<8x128xf32>
    %52 = vector.extract_strided_slice %51 {offsets = [0, 0], sizes = [8, 64], strides = [1, 1]} : vector<8x128xf32> to vector<8x64xf32>
    %c0_25 = arith.constant 0 : index
    %c0_26 = arith.constant 0 : index
    %53 = vector.load %arg3[%c0_25, %c0_26] : memref<8x64xf32, #tpu.memory_space<vmem>>, vector<8x64xf32>
    tpu.vector_store %arg3[%c0_25, %c0_26], %52 {strides = array<i32>} : memref<8x64xf32, #tpu.memory_space<vmem>>, vector<8x64xf32>,
    return
  }
}

</mosaic_0001>

<llo_original>
// kernel: encoder_forward.1
$region0: #{encoder_forward.1}
  #allocation0 [shape = 'u32[]', space=smem, size = 0x4, offset = 0x4, fixed_abs, tag = 'smem constant byte address 0x4 - core index']
  #allocation1 [shape = 'u32[144,128]{1,0:T(1,128)}', space=vmem, size = 0x12000, scoped, tag = 'internal scratch']
  %s0 = inlined_call_operand.hbm [shape: f32[8,64], index: 0, kind: input, shape index: {}]
  %s1 = inlined_call_operand.hbm [shape: bf16[320,256], index: 1, kind: input, shape index: {}]
  %s2 = inlined_call_operand.hbm [shape: f32[48,256], index: 2, kind: input, shape index: {}]
  %s3 = inlined_call_operand.hbm [shape: f32[8,64], index: 3, kind: output, shape index: {}]
  %s4 = sld [smem:[#allocation0]]
  $region34: #{encoder_forward.1} parent=0
    _
  %s6 = ssub.s32 1, %s4
  %s7 = scalar_select 0, %s6, %s4
  $region1: #{encoder_forward.1} parent=0
    #allocation2 [shape = 'u8[4096]{0}', space=vmem, size = 0x1000, scoped, tag = 'input window, operand 0, single buffered']
    #allocation3 [shape = 's32[1]{0}', space=sflag, size = 0x4, scoped, tag = 'scoped memory for encoder_forward.1']
    #allocation4 [shape = 's32[1]{0}', space=sflag, size = 0x4, scoped, tag = 'scoped memory for encoder_forward.1']
    #allocation5 [shape = 'u8[163840]{0}', space=vmem, size = 0x28000, scoped, tag = 'input window, operand 1, single buffered']
    #allocation6 [shape = 's32[1]{0}', space=sflag, size = 0x4, scoped, tag = 'scoped memory for encoder_forward.1']
    #allocation7 [shape = 'u8[49152]{0}', space=vmem, size = 0xc000, scoped, tag = 'input window, operand 2, single buffered']
    #allocation8 [shape = 'u8[4096]{0}', space=vmem, size = 0x1000, scoped, tag = 'output window, operand 0, single buffered']
    %8 = vsyncpa [#allocation3], 0
    %9 = vsyncpa [#allocation6], 0
    %10 = vsyncpa [#allocation4], 0
    // Predicated region
    $region2: #{encoder_forward.1} parent=1 // pred_check
      _
    $region3: #{encoder_forward.1} parent=1 // pred_check_branch
      %12 = sbr.rel (0) target = $region5
    $region4: #{encoder_forward.1} parent=1 // pred_region
      %s14 = ssub.s32 128, 128
      %15 = vsyncadd [#allocation3], %s14
      %s17 = sshll.u32 [#allocation2], 4
      %s18 = int_to_ptr.vmem [resolvable:$true] %s17
      %20 = dma.hbm_to_vmem [thread:$0]  %s0, 128, %s18, [#allocation3]
    $region5: #{encoder_forward.1} parent=1 // pred_fallthru
      _
    // Predicated region
    $region6: #{encoder_forward.1} parent=1 // pred_check
      _
    $region7: #{encoder_forward.1} parent=1 // pred_check_branch
      %22 = sbr.rel (0) target = $region9
    $region8: #{encoder_forward.1} parent=1 // pred_region
      %s24 = ssub.s32 5120, 5120
      %25 = vsyncadd [#allocation6], %s24
      %s26 = sshll.u32 [#allocation5], 4
      %s27 = int_to_ptr.vmem [resolvable:$true] %s26
      %32 = dma.hbm_to_vmem [thread:$0]  %s1, 5120, %s27, [#allocation6], 128, 128, 8
    $region9: #{encoder_forward.1} parent=1 // pred_fallthru
      _
    // Predicated region
    $region10: #{encoder_forward.1} parent=1 // pred_check
      _
    $region11: #{encoder_forward.1} parent=1 // pred_check_branch
      %34 = sbr.rel (0) target = $region13
    $region12: #{encoder_forward.1} parent=1 // pred_region
      %s36 = ssub.s32 1536, 1536
      %37 = vsyncadd [#allocation6], %s36
      %s38 = sshll.u32 [#allocation7], 4
      %s39 = int_to_ptr.vmem [resolvable:$true] %s38
      %44 = dma.hbm_to_vmem [thread:$0]  %s2, 1536, %s39, [#allocation6], 256, 256, 16
    $region13: #{encoder_forward.1} parent=1 // pred_fallthru
      _
    // Predicated region
    $region14: #{encoder_forward.1} parent=1 // pred_check
      _
    $region15: #{encoder_forward.1} parent=1 // pred_check_branch
      %46 = sbr.rel (0) target = $region17
    $region16: #{encoder_forward.1} parent=1 // pred_region
      %47 = dma.done [#allocation3], 128
    $region17: #{encoder_forward.1} parent=1 // pred_fallthru
      _
    // Predicated region
    $region18: #{encoder_forward.1} parent=1 // pred_check
      _
    $region19: #{encoder_forward.1} parent=1 // pred_check_branch
      %49 = sbr.rel (0) target = $region21
    $region20: #{encoder_forward.1} parent=1 // pred_region
      %50 = dma.done [#allocation6], 5120
    $region21: #{encoder_forward.1} parent=1 // pred_fallthru
      _
    // Predicated region
    $region22: #{encoder_forward.1} parent=1 // pred_check
      _
    $region23: #{encoder_forward.1} parent=1 // pred_check_branch
      %52 = sbr.rel (0) target = $region25
    $region24: #{encoder_forward.1} parent=1 // pred_region
      %53 = dma.done [#allocation6], 1536
    $region25: #{encoder_forward.1} parent=1 // pred_fallthru
      _
    %v55 = vld [vmem:[#allocation2] sm:$0xff]
    %v56 = vpack.c.bf16 %v55, %v55
    %v57 = vld [vmem:[#allocation5] sm:$0xff]
    %v58 = vld [vmem:[#allocation5 + $0x8] sm:$0xff]
    %v59 = vld [vmem:[#allocation5 + $0x10] sm:$0xff]
    %v60 = vld [vmem:[#allocation5 + $0x18] sm:$0xff]
    %v61 = vld [vmem:[#allocation5 + $0x20] sm:$0xff]
    %v62 = vld [vmem:[#allocation5 + $0x28] sm:$0xff]
    %v63 = vld [vmem:[#allocation5 + $0x30] sm:$0xff]
    %v64 = vld [vmem:[#allocation5 + $0x38] sm:$0xff]
    %v65 = vld [vmem:[#allocation7] sm:$0xff]
    %v66 = vld [vmem:[#allocation7 + $0x8] sm:$0xff]
    %v75 = vunpack.c.l.b16 %v57
    %v76 = vunpack.c.h.b16 %v57
    %v77 = vunpack.c.l.b16 %v58
    %v78 = vunpack.c.h.b16 %v58
    %v79 = vunpack.c.l.b16 %v59
    %v80 = vunpack.c.h.b16 %v59
    %v81 = vunpack.c.l.b16 %v60
    %v82 = vunpack.c.h.b16 %v60
    %v83 = vunpack.c.l.b16 %v61
    %v84 = vunpack.c.h.b16 %v61
    %v85 = vunpack.c.l.b16 %v62
    %v86 = vunpack.c.h.b16 %v62
    %v87 = vunpack.c.l.b16 %v63
    %v88 = vunpack.c.h.b16 %v63
    %v89 = vunpack.c.l.b16 %v64
    %v90 = vunpack.c.h.b16 %v64
    %v91 = vpack.c.b16 %v77, %v75
    %v92 = vpack.c.b16 %v78, %v76
    %v93 = vpack.c.b16 %v81, %v79
    %v94 = vpack.c.b16 %v82, %v80
    %v95 = vpack.c.b16 %v85, %v83
    %v96 = vpack.c.b16 %v86, %v84
    %v97 = vpack.c.b16 %v89, %v87
    %v98 = vpack.c.b16 %v90, %v88
    %vm107 = vcmask 523264
    %v109 = vsel %vm107, %v56, 0
    %111 = vmatprep.subr.bf16.mxu0 %v92
    %112 = vmatpush1.bf16.msra.mxu0 %v91
    %113 = vmatprep.subr.bf16.mxu0 %v94
    %114 = vmatpush1.bf16.msra.mxu0 %v93
    %115 = vmatprep.subr.bf16.mxu0 %v96
    %116 = vmatpush1.bf16.msra.mxu0 %v95
    %117 = vmatprep.subr.bf16.mxu0 %v98
    %118 = vmatpush1.bf16.msra.mxu0 %v97
    %119 = vmatprep.subr.bf16.mxu0 0
    %120 = vmatpush1.bf16.msra.mxu0 0
    %121 = vmatprep.subr.bf16.mxu0 0
    %122 = vmatpush1.bf16.msra.mxu0 0
    %123 = vmatprep.subr.bf16.mxu0 0
    %124 = vmatpush1.bf16.msra.mxu0 0
    %125 = vmatprep.subr.bf16.mxu0 0
    %126 = vmatpush1.bf16.msra.mxu0 0
    %127 = vmatprep.subr.bf16.mxu0 0
    %128 = vmatpush1.bf16.msra.mxu0 0
    %129 = vmatprep.subr.bf16.mxu0 0
    %130 = vmatpush1.bf16.msra.mxu0 0
    %131 = vmatprep.subr.bf16.mxu0 0
    %132 = vmatpush1.bf16.msra.mxu0 0
    %133 = vmatprep.subr.bf16.mxu0 0
    %134 = vmatpush1.bf16.msra.mxu0 0
    %135 = vmatprep.subr.bf16.mxu0 0
    %136 = vmatpush1.bf16.msra.mxu0 0
    %137 = vmatprep.subr.bf16.mxu0 0
    %138 = vmatpush1.bf16.msra.mxu0 0
    %139 = vmatprep.subr.bf16.mxu0 0
    %140 = vmatpush1.bf16.msra.mxu0 0
    %141 = vmatprep.subr.bf16.mxu0 0
    %142 = vmatpush1.bf16.msra.mxu0 0
    %143 = vmatprep.mubr.bf16.mxu0 0
    %144 = vmatmul.mubr.bf16.gmra.mrb[0].mxu0 %v109
    %v145 = vpop.f32.mrb[0].mxu0
    %v146 = vadd.f32 %v65, %v145
    %v147 = vpop.f32.mrb[0].mxu0
    %v148 = vadd.f32 %v66, %v147
    %v149 = vpop.f32.mrb[0].mxu0
    %v150 = vpop.f32.mrb[0].mxu0
    %151 = vdwg.mxu0
    %v152 = vmax.f32 %v146, 0.0
    %v153 = vmax.f32 %v148, 0.0
    %v154 = vpack.c.bf16 %v152, %v152
    %v155 = vpack.c.bf16 %v153, %v153
    %v156 = vld [vmem:[#allocation5 + $0x40] sm:$0xf]
    %v157 = vld [vmem:[#allocation5 + $0x48] sm:$0xf]
    %v158 = vld [vmem:[#allocation5 + $0x50] sm:$0xf]
    %v159 = vld [vmem:[#allocation5 + $0x58] sm:$0xf]
    %v160 = vld [vmem:[#allocation5 + $0x60] sm:$0xf]
    %v161 = vld [vmem:[#allocation5 + $0x68] sm:$0xf]
    %v162 = vld [vmem:[#allocation5 + $0x70] sm:$0xf]
    %v163 = vld [vmem:[#allocation5 + $0x78] sm:$0xf]
    %v164 = vld [vmem:[#allocation5 + $0x80] sm:$0xf]
    %v165 = vld [vmem:[#allocation5 + $0x88] sm:$0xf]
    %v166 = vld [vmem:[#allocation5 + $0x90] sm:$0xf]
    %v167 = vld [vmem:[#allocation5 + $0x98] sm:$0xf]
    %v168 = vld [vmem:[#allocation5 + $0xa0] sm:$0xf]
    %v169 = vld [vmem:[#allocation5 + $0xa8] sm:$0xf]
    %v170 = vld [vmem:[#allocation5 + $0xb0] sm:$0xf]
    %v171 = vld [vmem:[#allocation5 + $0xb8] sm:$0xf]
    %v172 = vld [vmem:[#allocation5 + $0xc0] sm:$0xf]
    %v173 = vld [vmem:[#allocation5 + $0xc8] sm:$0xf]
    %v174 = vld [vmem:[#allocation5 + $0xd0] sm:$0xf]
    %v175 = vld [vmem:[#allocation5 + $0xd8] sm:$0xf]
    %v176 = vld [vmem:[#allocation5 + $0xe0] sm:$0xf]
    %v177 = vld [vmem:[#allocation5 + $0xe8] sm:$0xf]
    %v178 = vld [vmem:[#allocation5 + $0xf0] sm:$0xf]
    %v179 = vld [vmem:[#allocation5 + $0xf8] sm:$0xf]
    %v180 = vld [vmem:[#allocation5 + $0x100] sm:$0xf]
    %v181 = vld [vmem:[#allocation5 + $0x108] sm:$0xf]
    %v182 = vld [vmem:[#allocation5 + $0x110] sm:$0xf]
    %v183 = vld [vmem:[#allocation5 + $0x118] sm:$0xf]
    %v184 = vld [vmem:[#allocation5 + $0x120] sm:$0xf]
    %v185 = vld [vmem:[#allocation5 + $0x128] sm:$0xf]
    %v186 = vld [vmem:[#allocation5 + $0x130] sm:$0xf]
    %v187 = vld [vmem:[#allocation5 + $0x138] sm:$0xf]
    %v188 = vld [vmem:[#allocation7 + $0x10] sm:$0xff]
    %v221 = vunpack.c.l.b16 %v156
    %v222 = vunpack.c.l.b16 %v157
    %v223 = vunpack.c.l.b16 %v158
    %v224 = vunpack.c.l.b16 %v159
    %v225 = vunpack.c.l.b16 %v160
    %v226 = vunpack.c.l.b16 %v161
    %v227 = vunpack.c.l.b16 %v162
    %v228 = vunpack.c.l.b16 %v163
    %v229 = vunpack.c.l.b16 %v164
    %v230 = vunpack.c.l.b16 %v165
    %v231 = vunpack.c.l.b16 %v166
    %v232 = vunpack.c.l.b16 %v167
    %v233 = vunpack.c.l.b16 %v168
    %v234 = vunpack.c.l.b16 %v169
    %v235 = vunpack.c.l.b16 %v170
    %v236 = vunpack.c.l.b16 %v171
    %v237 = vunpack.c.l.b16 %v172
    %v238 = vunpack.c.l.b16 %v173
    %v239 = vunpack.c.l.b16 %v174
    %v240 = vunpack.c.l.b16 %v175
    %v241 = vunpack.c.l.b16 %v176
    %v242 = vunpack.c.l.b16 %v177
    %v243 = vunpack.c.l.b16 %v178
    %v244 = vunpack.c.l.b16 %v179
    %v245 = vunpack.c.l.b16 %v180
    %v246 = vunpack.c.l.b16 %v181
    %v247 = vunpack.c.l.b16 %v182
    %v248 = vunpack.c.l.b16 %v183
    %v249 = vunpack.c.l.b16 %v184
    %v250 = vunpack.c.l.b16 %v185
    %v251 = vunpack.c.l.b16 %v186
    %v252 = vunpack.c.l.b16 %v187
    %v253 = vpack.c.b16 %v222, %v221
    %v254 = vpack.c.b16 %v224, %v223
    %v255 = vpack.c.b16 %v226, %v225
    %v256 = vpack.c.b16 %v228, %v227
    %v257 = vpack.c.b16 %v230, %v229
    %v258 = vpack.c.b16 %v232, %v231
    %v259 = vpack.c.b16 %v234, %v233
    %v260 = vpack.c.b16 %v236, %v235
    %v261 = vpack.c.b16 %v238, %v237
    %v262 = vpack.c.b16 %v240, %v239
    %v263 = vpack.c.b16 %v242, %v241
    %v264 = vpack.c.b16 %v244, %v243
    %v265 = vpack.c.b16 %v246, %v245
    %v266 = vpack.c.b16 %v248, %v247
    %v267 = vpack.c.b16 %v250, %v249
    %v268 = vpack.c.b16 %v252, %v251
    %285 = vmatprep.subr.bf16.mxu0 0
    %286 = vmatpush1.bf16.msra.mxu0 %v253
    %287 = vmatprep.subr.bf16.mxu0 0
    %288 = vmatpush1.bf16.msra.mxu0 %v254
    %289 = vmatprep.subr.bf16.mxu0 0
    %290 = vmatpush1.bf16.msra.mxu0 %v255
    %291 = vmatprep.subr.bf16.mxu0 0
    %292 = vmatpush1.bf16.msra.mxu0 %v256
    %293 = vmatprep.subr.bf16.mxu0 0
    %294 = vmatpush1.bf16.msra.mxu0 %v257
    %295 = vmatprep.subr.bf16.mxu0 0
    %296 = vmatpush1.bf16.msra.mxu0 %v258
    %297 = vmatprep.subr.bf16.mxu0 0
    %298 = vmatpush1.bf16.msra.mxu0 %v259
    %299 = vmatprep.subr.bf16.mxu0 0
    %300 = vmatpush1.bf16.msra.mxu0 %v260
    %301 = vmatprep.subr.bf16.mxu0 0
    %302 = vmatpush1.bf16.msra.mxu0 %v261
    %303 = vmatprep.subr.bf16.mxu0 0
    %304 = vmatpush1.bf16.msra.mxu0 %v262
    %305 = vmatprep.subr.bf16.mxu0 0
    %306 = vmatpush1.bf16.msra.mxu0 %v263
    %307 = vmatprep.subr.bf16.mxu0 0
    %308 = vmatpush1.bf16.msra.mxu0 %v264
    %309 = vmatprep.subr.bf16.mxu0 0
    %310 = vmatpush1.bf16.msra.mxu0 %v265
    %311 = vmatprep.subr.bf16.mxu0 0
    %312 = vmatpush1.bf16.msra.mxu0 %v266
    %313 = vmatprep.subr.bf16.mxu0 0
    %314 = vmatpush1.bf16.msra.mxu0 %v267
    %315 = vmatprep.subr.bf16.mxu0 0
    %316 = vmatpush1.bf16.msra.mxu0 %v268
    %317 = vmatprep.mubr.bf16.mxu0 %v155
    %318 = vmatmul.mubr.bf16.gmra.mrb[0].mxu0 %v154
    %v319 = vpop.f32.mrb[0].mxu0
    %v320 = vadd.f32 %v188, %v319
    %v321 = vpop.f32.mrb[0].mxu0
    %v322 = vpop.f32.mrb[0].mxu0
    %v323 = vpop.f32.mrb[0].mxu0
    %324 = vdwg.mxu0
    %v325 = vmax.f32 %v320, 0.0
    %v326 = vpack.c.bf16 %v325, %v325
    %v327 = vld [vmem:[#allocation5 + $0x44] sm:$0xf]
    %v328 = vld [vmem:[#allocation5 + $0x4c] sm:$0xf]
    %v329 = vld [vmem:[#allocation5 + $0x54] sm:$0xf]
    %v330 = vld [vmem:[#allocation5 + $0x5c] sm:$0xf]
    %v331 = vld [vmem:[#allocation5 + $0x64] sm:$0xf]
    %v332 = vld [vmem:[#allocation5 + $0x6c] sm:$0xf]
    %v333 = vld [vmem:[#allocation5 + $0x74] sm:$0xf]
    %v334 = vld [vmem:[#allocation5 + $0x7c] sm:$0xf]
    %v335 = vld [vmem:[#allocation5 + $0x84] sm:$0xf]
    %v336 = vld [vmem:[#allocation5 + $0x8c] sm:$0xf]
    %v337 = vld [vmem:[#allocation5 + $0x94] sm:$0xf]
    %v338 = vld [vmem:[#allocation5 + $0x9c] sm:$0xf]
    %v339 = vld [vmem:[#allocation5 + $0xa4] sm:$0xf]
    %v340 = vld [vmem:[#allocation5 + $0xac] sm:$0xf]
    %v341 = vld [vmem:[#allocation5 + $0xb4] sm:$0xf]
    %v342 = vld [vmem:[#allocation5 + $0xbc] sm:$0xf]
    %v343 = vld [vmem:[#allocation7 + $0x20] sm:$0xff]
    %v360 = vunpack.c.l.b16 %v327
    %v361 = vunpack.c.l.b16 %v328
    %v362 = vunpack.c.l.b16 %v329
    %v363 = vunpack.c.l.b16 %v330
    %v364 = vunpack.c.l.b16 %v331
    %v365 = vunpack.c.l.b16 %v332
    %v366 = vunpack.c.l.b16 %v333
    %v367 = vunpack.c.l.b16 %v334
    %v368 = vunpack.c.l.b16 %v335
    %v369 = vunpack.c.l.b16 %v336
    %v370 = vunpack.c.l.b16 %v337
    %v371 = vunpack.c.l.b16 %v338
    %v372 = vunpack.c.l.b16 %v339
    %v373 = vunpack.c.l.b16 %v340
    %v374 = vunpack.c.l.b16 %v341
    %v375 = vunpack.c.l.b16 %v342
    %v376 = vpack.c.b16 %v361, %v360
    %v377 = vpack.c.b16 %v363, %v362
    %v378 = vpack.c.b16 %v365, %v364
    %v379 = vpack.c.b16 %v367, %v366
    %v380 = vpack.c.b16 %v369, %v368
    %v381 = vpack.c.b16 %v371, %v370
    %v382 = vpack.c.b16 %v373, %v372
    %v383 = vpack.c.b16 %v375, %v374
    %392 = vmatprep.subr.bf16.mxu0 0
    %393 = vmatpush1.bf16.msra.mxu0 %v376
    %394 = vmatprep.subr.bf16.mxu0 0
    %395 = vmatpush1.bf16.msra.mxu0 %v377
    %396 = vmatprep.subr.bf16.mxu0 0
    %397 = vmatpush1.bf16.msra.mxu0 %v378
    %398 = vmatprep.subr.bf16.mxu0 0
    %399 = vmatpush1.bf16.msra.mxu0 %v379
    %400 = vmatprep.subr.bf16.mxu0 0
    %401 = vmatpush1.bf16.msra.mxu0 %v380
    %402 = vmatprep.subr.bf16.mxu0 0
    %403 = vmatpush1.bf16.msra.mxu0 %v381
    %404 = vmatprep.subr.bf16.mxu0 0
    %405 = vmatpush1.bf16.msra.mxu0 %v382
    %406 = vmatprep.subr.bf16.mxu0 0
    %407 = vmatpush1.bf16.msra.mxu0 %v383
    %408 = vmatprep.subr.bf16.mxu0 0
    %409 = vmatpush1.bf16.msra.mxu0 0
    %410 = vmatprep.subr.bf16.mxu0 0
    %411 = vmatpush1.bf16.msra.mxu0 0
    %412 = vmatprep.subr.bf16.mxu0 0
    %413 = vmatpush1.bf16.msra.mxu0 0
    %414 = vmatprep.subr.bf16.mxu0 0
    %415 = vmatpush1.bf16.msra.mxu0 0
    %416 = vmatprep.subr.bf16.mxu0 0
    %417 = vmatpush1.bf16.msra.mxu0 0
    %418 = vmatprep.subr.bf16.mxu0 0
    %419 = vmatpush1.bf16.msra.mxu0 0
    %420 = vmatprep.subr.bf16.mxu0 0
    %421 = vmatpush1.bf16.msra.mxu0 0
    %422 = vmatprep.subr.bf16.mxu0 0
    %423 = vmatpush1.bf16.msra.mxu0 0
    %424 = vmatprep.mubr.bf16.mxu0 0
    %425 = vmatmul.mubr.bf16.gmra.mrb[0].mxu0 %v326
    %v426 = vpop.f32.mrb[0].mxu0
    %v427 = vadd.f32 %v343, %v426
    %v428 = vpop.f32.mrb[0].mxu0
    %v429 = vpop.f32.mrb[0].mxu0
    %v430 = vpop.f32.mrb[0].mxu0
    %431 = vdwg.mxu0
    %v432 = vrot.slane %v427, 4
    %v433 = vadd.f32 %v427, %v432
    %v434 = vrot.slane %v433, 2
    %v435 = vadd.f32 %v433, %v434
    %v436 = vrot.slane %v435, 1
    %v437 = vadd.f32 %v435, %v436
    %v438 = vmul.f32 %v437, 0.125
    %v439 = vmul.f32 %v427, %v427
    %v440 = vrot.slane %v439, 4
    %v441 = vadd.f32 %v439, %v440
    %v442 = vrot.slane %v441, 2
    %v443 = vadd.f32 %v441, %v442
    %v444 = vrot.slane %v443, 1
    %v445 = vadd.f32 %v443, %v444
    %v446 = vmul.f32 %v445, 0.125
    %v447 = vmul.f32 %v438, %v438
    %v448 = vsub.f32 %v446, %v447
    %v449 = vmax.f32 %v448, 0.0
    %v450 = vadd.f32 %v449, 1e-05
    %v451 = vrsqrt.pop %v450
    %v452 = vld [vmem:[#allocation7 + $0x30] sm:$0xff]
    %v453 = vmul.f32 %v451, %v452
    %v454 = vmul.f32 %v427, %v453
    %v455 = vld [vmem:[#allocation7 + $0x40] sm:$0xff]
    %v456 = vmul.f32 %v438, %v453
    %v457 = vsub.f32 %v455, %v456
    %v458 = vadd.f32 %v454, %v457
    %v459 = vmax.f32 %v458, 0.0
    %v460 = vpack.c.bf16 %v459, %v459
    %v461 = vld [vmem:[#allocation5 + $0xc4] sm:$0xf]
    %v462 = vld [vmem:[#allocation5 + $0xcc] sm:$0xf]
    %v463 = vld [vmem:[#allocation5 + $0xd4] sm:$0xf]
    %v464 = vld [vmem:[#allocation5 + $0xdc] sm:$0xf]
    %v465 = vld [vmem:[#allocation5 + $0xe4] sm:$0xf]
    %v466 = vld [vmem:[#allocation5 + $0xec] sm:$0xf]
    %v467 = vld [vmem:[#allocation5 + $0xf4] sm:$0xf]
    %v468 = vld [vmem:[#allocation5 + $0xfc] sm:$0xf]
    %v469 = vld [vmem:[#allocation5 + $0x104] sm:$0xf]
    %v470 = vld [vmem:[#allocation5 + $0x10c] sm:$0xf]
    %v471 = vld [vmem:[#allocation5 + $0x114] sm:$0xf]
    %v472 = vld [vmem:[#allocation5 + $0x11c] sm:$0xf]
    %v473 = vld [vmem:[#allocation5 + $0x124] sm:$0xf]
    %v474 = vld [vmem:[#allocation5 + $0x12c] sm:$0xf]
    %v475 = vld [vmem:[#allocation5 + $0x134] sm:$0xf]
    %v476 = vld [vmem:[#allocation5 + $0x13c] sm:$0xf]
    %v477 = vld [vmem:[#allocation7 + $0x50] sm:$0xff]
    %v494 = vunpack.c.l.b16 %v461
    %v495 = vunpack.c.l.b16 %v462
    %v496 = vunpack.c.l.b16 %v463
    %v497 = vunpack.c.l.b16 %v464
    %v498 = vunpack.c.l.b16 %v465
    %v499 = vunpack.c.l.b16 %v466
    %v500 = vunpack.c.l.b16 %v467
    %v501 = vunpack.c.l.b16 %v468
    %v502 = vunpack.c.l.b16 %v469
    %v503 = vunpack.c.l.b16 %v470
    %v504 = vunpack.c.l.b16 %v471
    %v505 = vunpack.c.l.b16 %v472
    %v506 = vunpack.c.l.b16 %v473
    %v507 = vunpack.c.l.b16 %v474
    %v508 = vunpack.c.l.b16 %v475
    %v509 = vunpack.c.l.b16 %v476
    %v510 = vpack.c.b16 %v495, %v494
    %v511 = vpack.c.b16 %v497, %v496
    %v512 = vpack.c.b16 %v499, %v498
    %v513 = vpack.c.b16 %v501, %v500
    %v514 = vpack.c.b16 %v503, %v502
    %v515 = vpack.c.b16 %v505, %v504
    %v516 = vpack.c.b16 %v507, %v506
    %v517 = vpack.c.b16 %v509, %v508
    %526 = vmatprep.subr.bf16.mxu0 0
    %527 = vmatpush1.bf16.msra.mxu0 %v510
    %528 = vmatprep.subr.bf16.mxu0 0
    %529 = vmatpush1.bf16.msra.mxu0 %v511
    %530 = vmatprep.subr.bf16.mxu0 0
    %531 = vmatpush1.bf16.msra.mxu0 %v512
    %532 = vmatprep.subr.bf16.mxu0 0
    %533 = vmatpush1.bf16.msra.mxu0 %v513
    %534 = vmatprep.subr.bf16.mxu0 0
    %535 = vmatpush1.bf16.msra.mxu0 %v514
    %536 = vmatprep.subr.bf16.mxu0 0
    %537 = vmatpush1.bf16.msra.mxu0 %v515
    %538 = vmatprep.subr.bf16.mxu0 0
    %539 = vmatpush1.bf16.msra.mxu0 %v516
    %540 = vmatprep.subr.bf16.mxu0 0
    %541 = vmatpush1.bf16.msra.mxu0 %v517
    %542 = vmatprep.subr.bf16.mxu0 0
    %543 = vmatpush1.bf16.msra.mxu0 0
    %544 = vmatprep.subr.bf16.mxu0 0
    %545 = vmatpush1.bf16.msra.mxu0 0
    %546 = vmatprep.subr.bf16.mxu0 0
    %547 = vmatpush1.bf16.msra.mxu0 0
    %548 = vmatprep.subr.bf16.mxu0 0
    %549 = vmatpush1.bf16.msra.mxu0 0
    %550 = vmatprep.subr.bf16.mxu0 0
    %551 = vmatpush1.bf16.msra.mxu0 0
    %552 = vmatprep.subr.bf16.mxu0 0
    %553 = vmatpush1.bf16.msra.mxu0 0
    %554 = vmatprep.subr.bf16.mxu0 0
    %555 = vmatpush1.bf16.msra.mxu0 0
    %556 = vmatprep.subr.bf16.mxu0 0
    %557 = vmatpush1.bf16.msra.mxu0 0
    %558 = vmatprep.mubr.bf16.mxu0 0
    %559 = vmatmul.mubr.bf16.gmra.mrb[0].mxu0 %v460
    %v560 = vpop.f32.mrb[0].mxu0
    %v561 = vadd.f32 %v477, %v560
    %v562 = vpop.f32.mrb[0].mxu0
    %v563 = vpop.f32.mrb[0].mxu0
    %v564 = vpop.f32.mrb[0].mxu0
    %565 = vdwg.mxu0
    %566 = vst.msk [vmem:[#allocation8] sm:$0xff] %vm107, %v561
    // Predicated region
    $region26: #{encoder_forward.1} parent=1 // pred_check
      _
    $region27: #{encoder_forward.1} parent=1 // pred_check_branch
      %568 = sbr.rel (0) target = $region29
    $region28: #{encoder_forward.1} parent=1 // pred_region
      %s570 = ssub.s32 128, 128
      %571 = vsyncadd [#allocation4], %s570
      %s573 = sshll.u32 [#allocation8], 4
      %s574 = int_to_ptr.vmem [resolvable:$true] %s573
      %576 = dma.vmem_to_hbm [thread:$0]  %s574, 128, %s3, [#allocation4]
    $region29: #{encoder_forward.1} parent=1 // pred_fallthru
      _
    // Predicated region
    $region30: #{encoder_forward.1} parent=1 // pred_check
      _
    $region31: #{encoder_forward.1} parent=1 // pred_check_branch
      %578 = sbr.rel (0) target = $region33
    $region32: #{encoder_forward.1} parent=1 // pred_region
      %579 = dma.done [#allocation4], 128
    $region33: #{encoder_forward.1} parent=1 // pred_fallthru
      _
    %580 = vsyncpa [#allocation3], 1
    %581 = vsyncpa [#allocation6], 1
    %582 = vsyncpa [#allocation4], 1

</llo_original>
